<compile_context>
chip_gen: v7x
topology: tpu7x:2x2x1
jax: 0.10.0
libtpu: 0.0.40
codegen_flags: <defaults>
</compile_context>

<pallas_src>
import numpy as np
import jax
import jax.numpy as jnp
from jax.experimental import pallas as pl
from jax.experimental.pallas import tpu as pltpu


# ----------------------------------------------------------------------------- kernels

def _cpb_table_kernel(relpos_ref, w0t_ref, b0_ref, w1t_ref, b1_ref,
                      w2t_ref, b2_ref, table_ref):
    """Computes the continuous-position MLP table in transposed layout: (heads, Rp)."""
    x = relpos_ref[...]                              # (C, Rp) f32, coords on sublanes
    w0t = w0t_ref[...]                               # (D, C)
    C, Rp = x.shape
    D = w0t.shape[0]

    # layer 0: Linear(num_dims -> dim) + SiLU.  num_dims is tiny (1..3), so do it as
    # broadcasted outer-product mul-adds instead of a degenerate-K MXU matmul.
    h = jnp.broadcast_to(b0_ref[...], (D, Rp))       # (D, Rp)
    for c in range(C):                               # static python loop over num_dims
        h = h + w0t[:, c:c + 1] * x[c:c + 1, :]
    h = h * jax.nn.sigmoid(h)                        # SiLU (EUP)

    # layer 1: Linear(dim -> dim) + SiLU  (MXU)
    h = jnp.dot(w1t_ref[...], h, preferred_element_type=jnp.float32) + b1_ref[...]
    h = h * jax.nn.sigmoid(h)

    # layer 2: Linear(dim -> heads)  ->  (heads, Rp), lane-dense writeback
    table_ref[...] = (jnp.dot(w2t_ref[...], h, preferred_element_type=jnp.float32)
                      + b2_ref[...])


def _cpb_gather_kernel(idx_ref, table_ref, out_ref):
    """Gather table[:, idx] as a tiled one-hot MXU matmul, accumulating over Rp tiles.

    Emits a lane-dense (H, TILE_NN) tile; the output block is VMEM-resident across the
    trailing "arbitrary" Rp axis and serves as the accumulator.
    """
    r = pl.program_id(1)

    @pl.when(r == 0)
    def _():
        out_ref[...] = jnp.zeros_like(out_ref)

    table = table_ref[...]                           # (H, TILE_RP) f32
    idx = idx_ref[...]                               # (1, TILE_NN) int32, lane-major
    tile_rp = table.shape[1]
    tile_nn = idx.shape[1]

    # one-hot: iota along the sublane (Rp) axis, offset into this Rp tile, compared
    # against the lane-major indices.
    base = r * tile_rp
    riota = jax.lax.broadcasted_iota(jnp.int32, (tile_rp, tile_nn), 0) + base
    onehot = (riota == idx).astype(jnp.float32)      # (TILE_RP, TILE_NN)

    # (H, TILE_RP) @ (TILE_RP, TILE_NN) -> (H, TILE_NN); keep f32 so selection is exact.
    out_ref[...] += jnp.dot(table, onehot, preferred_element_type=jnp.float32)


# -------------------------------------------------------------------------- host glue

def _build_indices(dimensions):
    """Replicates the torch index math on the host (integer glue)."""
    num_dims = len(dimensions)
    dims = np.asarray(dimensions, dtype=np.int64)
    rel_pos_shape = 2 * dims - 1
    R = int(np.prod(rel_pos_shape))

    # strides = flip(pad(flip(rel_pos_shape).cumprod(), (1,-1), value=1))
    cp = np.cumprod(rel_pos_shape[::-1])
    strides = np.concatenate([[1], cp[:-1]])[::-1]

    pos = np.meshgrid(*[np.arange(d) for d in dims], indexing='ij')
    grid = np.stack(pos, axis=-1).reshape(-1, num_dims)        # (N, C)
    N = grid.shape[0]
    rel_dist = grid[:, None, :] - grid[None, :, :]             # (N, N, C)
    rel_dist = (rel_dist + (dims - 1)) * strides
    idx = rel_dist.sum(-1).astype(np.int32)                    # (N, N) in [0, R)

    rel_positions = np.meshgrid(*[np.arange(-d + 1, d) for d in dims], indexing='ij')
    rel_pos_grid = np.stack(rel_positions, axis=-1).reshape(-1, num_dims).astype(np.float32)
    return rel_pos_grid, idx, N, R, num_dims


def init_params(key, num_dims, dim, heads):
    """Deterministic PyTorch-Linear-style init (uniform +-1/sqrt(fan_in))."""
    ks = jax.random.split(key, 6)

    def lin(kw, kb, fan_in, fan_out):
        bound = 1.0 / np.sqrt(fan_in)
        w = jax.random.uniform(kw, (fan_in, fan_out), jnp.float32, -bound, bound)
        b = jax.random.uniform(kb, (1, fan_out), jnp.float32, -bound, bound)
        return w, b

    w0, b0 = lin(ks[0], ks[1], num_dims, dim)
    w1, b1 = lin(ks[2], ks[3], dim, dim)
    w2, b2 = lin(ks[4], ks[5], dim, heads)
    return dict(w0=w0, b0=b0, w1=w1, b1=b1, w2=w2, b2=b2)


def _round_up(x, m):
    return ((x + m - 1) // m) * m


# VMEM budget for one (TILE_RP, TILE_NN) f32 one-hot tile (the int32 iota temp roughly
# doubles it; together with double-buffered idx/out tiles and the table tile this stays
# well under the 32 MiB scoped-VMEM limit on all chips).
_ONEHOT_TILE_BUDGET_BYTES = 6 * 1024 * 1024
_MAX_TILE_NN = 2048


def _pick_tiles(nn, rp0):
    """Choose (TILE_NN, NN_pad, TILE_RP, Rp_pad); all tile dims are multiples of 128."""
    nn_min = max(128, _round_up(nn, 128))
    tile_nn = min(_MAX_TILE_NN, nn_min)
    nn_pad = _round_up(nn_min, tile_nn)
    cap_rp = max(128, (_ONEHOT_TILE_BUDGET_BYTES // (4 * tile_nn)) // 128 * 128)
    tile_rp = min(rp0, cap_rp)
    rp_pad = _round_up(rp0, tile_rp)
    return tile_nn, nn_pad, tile_rp, rp_pad


def continuous_position_bias(params, dimensions, heads):
    rel_pos_grid, idx, N, R, num_dims = _build_indices(dimensions)

    NN = N * N
    Rp0 = max(128, _round_up(R, 128))
    TILE_NN, NN_pad, TILE_RP, Rp = _pick_tiles(NN, Rp0)

    # pad the relative-position table to a lane-friendly size; padded columns produce
    # garbage table entries but are never selected (idx < R <= Rp).
    relpos_t = np.zeros((num_dims, Rp), np.float32)
    relpos_t[:, :R] = rel_pos_grid.T                            # (C, Rp), lane-dense

    idx_row = np.zeros((1, NN_pad), np.int32)                   # lane-major indices
    idx_row[0, :NN] = idx.reshape(-1)

    num_nn_tiles = NN_pad // TILE_NN
    num_rp_tiles = Rp // TILE_RP

    # transposed parameters (host-side, free): the whole pipeline runs lane-dense.
    w0t = params['w0'].T                                        # (D, C)
    b0c = params['b0'].T                                        # (D, 1)
    w1t = params['w1'].T                                        # (D, D)
    b1c = params['b1'].T                                        # (D, 1)
    w2t = params['w2'].T                                        # (H, D)
    b2c = params['b2'].T                                        # (H, 1)

    # ---- kernel A: MLP table, computed exactly once per call --------------------------
    table_args = (jnp.asarray(relpos_t), w0t, b0c, w1t, b1c, w2t, b2c)

    def full_spec(a):
        nd = a.ndim
        return pl.BlockSpec(a.shape, lambda i, _nd=nd: (0,) * _nd)

    table = pl.pallas_call(
        _cpb_table_kernel,
        out_shape=jax.ShapeDtypeStruct((heads, Rp), jnp.float32),
        grid=(1,),
        in_specs=[full_spec(a) for a in table_args],
        out_specs=pl.BlockSpec((heads, Rp), lambda i: (0, 0)),
        compiler_params=pltpu.CompilerParams(dimension_semantics=("arbitrary",)),
    )(*table_args)

    # ---- kernel B: tiled one-hot gather; NN axis "parallel", Rp axis = reduction ------
    out = pl.pallas_call(
        _cpb_gather_kernel,
        out_shape=jax.ShapeDtypeStruct((heads, NN_pad), jnp.float32),
        grid=(num_nn_tiles, num_rp_tiles),
        in_specs=[
            pl.BlockSpec((1, TILE_NN), lambda i, r: (0, i)),     # idx tile (lane-major)
            pl.BlockSpec((heads, TILE_RP), lambda i, r: (0, r)),  # table Rp tile
        ],
        out_specs=pl.BlockSpec((heads, TILE_NN), lambda i, r: (0, i)),
        compiler_params=pltpu.CompilerParams(
            dimension_semantics=("parallel", "arbitrary"),
            vmem_limit_bytes=32 * 1024 * 1024,
        ),
        cost_estimate=pl.CostEstimate(
            flops=2 * heads * Rp * NN_pad,
            transcendentals=0,
            bytes_accessed=(NN_pad * 4
                            + num_nn_tiles * heads * Rp * 4
                            + heads * NN_pad * 4),
        ),
    )(jnp.asarray(idx_row), table)

    # glue: (heads, NN) -> (heads, N, N) is a free reshape (no transpose pass over HBM).
    return out[:, :NN].reshape(heads, N, N)


def reference_forward(params, dimensions, heads):
    """Pure-JAX reference mirroring the PyTorch forward."""
    rel_pos_grid, idx, N, R, _ = _build_indices(dimensions)
    x = jnp.asarray(rel_pos_grid)
    h = x @ params['w0'] + params['b0']
    h = h * jax.nn.sigmoid(h)
    h = h @ params['w1'] + params['b1']
    h = h * jax.nn.sigmoid(h)
    table = h @ params['w2'] + params['b2']              # (R, heads)
    bias = table[jnp.asarray(idx)]                       # (N, N, heads)
    return jnp.transpose(bias, (2, 0, 1))                # (heads, N, N)


if __name__ == "__main__":
    dim, heads = 32, 8

    # config 1: module defaults (num_dims=1), forward(16) -> (heads, 16, 16)
    params1 = init_params(jax.random.PRNGKey(0), 1, dim, heads)
    out1 = jax.block_until_ready(continuous_position_bias(params1, (16,), heads))
    ref1 = reference_forward(params1, (16,), heads)
    assert out1.shape == (heads, 16, 16) and out1.dtype == jnp.float32, out1.shape
    assert jnp.allclose(out1, ref1, atol=1e-4, rtol=1e-4), float(jnp.max(jnp.abs(out1 - ref1)))

    # config 2: 2-D positions, forward(8, 8) -> (heads, 64, 64); exercises the multi-tile
    # NN grid (NN=4096 -> 2 tiles of 2048) with the table resident across Rp steps.
    params2 = init_params(jax.random.PRNGKey(0), 2, dim, heads)
    out2 = jax.block_until_ready(continuous_position_bias(params2, (8, 8), heads))
    ref2 = reference_forward(params2, (8, 8), heads)
    assert out2.shape == (heads, 64, 64) and out2.dtype == jnp.float32, out2.shape
    assert jnp.allclose(out2, ref2, atol=1e-4, rtol=1e-4), float(jnp.max(jnp.abs(out2 - ref2)))

    print("KERNEL_OK")
</pallas_src>

<mosaic_0001>
module attributes {stable_mosaic.version = 11 : i64} {
  func.func @_cpb_table_kernel(%arg0: i32, %arg1: memref<1x128xf32, #tpu.memory_space<vmem>>, %arg2: memref<32x1xf32, #tpu.memory_space<vmem>>, %arg3: memref<32x1xf32, #tpu.memory_space<vmem>>, %arg4: memref<32x32xf32, #tpu.memory_space<vmem>>, %arg5: memref<32x1xf32, #tpu.memory_space<vmem>>, %arg6: memref<8x32xf32, #tpu.memory_space<vmem>>, %arg7: memref<8x1xf32, #tpu.memory_space<vmem>>, %arg8: memref<8x128xf32, #tpu.memory_space<vmem>>) attributes {dimension_semantics = [#tpu.dimension_semantics<arbitrary>], iteration_bounds = array<i64: 1>, scalar_prefetch = 0 : i64, scratch_operands = 0 : i64, tpu.core_type = #tpu.core_type<tc>, window_params = [{pipeline_mode = #tpu.pipeline_mode<synchronous>, transform_indices = @transform_0, window_bounds = array<i64: 1, 128>}, {pipeline_mode = #tpu.pipeline_mode<synchronous>, transform_indices = @transform_1, window_bounds = array<i64: 32, 1>}, {pipeline_mode = #tpu.pipeline_mode<synchronous>, transform_indices = @transform_2, window_bounds = array<i64: 32, 1>}, {pipeline_mode = #tpu.pipeline_mode<synchronous>, transform_indices = @transform_3, window_bounds = array<i64: 32, 32>}, {pipeline_mode = #tpu.pipeline_mode<synchronous>, transform_indices = @transform_4, window_bounds = array<i64: 32, 1>}, {pipeline_mode = #tpu.pipeline_mode<synchronous>, transform_indices = @transform_5, window_bounds = array<i64: 8, 32>}, {pipeline_mode = #tpu.pipeline_mode<synchronous>, transform_indices = @transform_6, window_bounds = array<i64: 8, 1>}, {pipeline_mode = #tpu.pipeline_mode<synchronous>, transform_indices = @transform_7, window_bounds = array<i64: 8, 128>}]} {
    %c0 = arith.constant 0 : index
    %c0_0 = arith.constant 0 : index
    %0 = vector.load %arg1[%c0, %c0_0] : memref<1x128xf32, #tpu.memory_space<vmem>>, vector<1x128xf32>
    %c0_1 = arith.constant 0 : index
    %c0_2 = arith.constant 0 : index
    %1 = vector.load %arg2[%c0_1, %c0_2] : memref<32x1xf32, #tpu.memory_space<vmem>>, vector<32x1xf32>
    %c0_3 = arith.constant 0 : index
    %c0_4 = arith.constant 0 : index
    %2 = vector.load %arg3[%c0_3, %c0_4] : memref<32x1xf32, #tpu.memory_space<vmem>>, vector<32x1xf32>
    %3 = vector.shape_cast %2 : vector<32x1xf32> to vector<32x1xf32>
    %4 = vector.broadcast %3 : vector<32x1xf32> to vector<32x128xf32>
    %5 = vector.broadcast %1 : vector<32x1xf32> to vector<32x128xf32>
    %6 = vector.broadcast %0 : vector<1x128xf32> to vector<32x128xf32>
    %7 = arith.mulf %5, %6 : vector<32x128xf32>
    %8 = arith.addf %4, %7 : vector<32x128xf32>
    %9 = arith.negf %8 : vector<32x128xf32>
    %10 = math.exp %9 : vector<32x128xf32>
    %cst = arith.constant 1.000000e+00 : f32
    %11 = vector.broadcast %cst : f32 to vector<32x128xf32>
    %12 = arith.addf %11, %10 : vector<32x128xf32>
    %13 = arith.divf %11, %12 : vector<32x128xf32>
    %14 = arith.mulf %8, %13 : vector<32x128xf32>
    %c0_5 = arith.constant 0 : index
    %c0_6 = arith.constant 0 : index
    %15 = vector.load %arg4[%c0_5, %c0_6] : memref<32x32xf32, #tpu.memory_space<vmem>>, vector<32x32xf32>
    %cst_7 = arith.constant dense<0.000000e+00> : vector<32x128xf32>
    %16 = tpu.matmul %15, %14, %cst_7 {dimension_numbers = #tpu.dot_dimension_numbers<[1], [0], [0], [1], [0, 0, 1, 1], [], []>} : vector<32x32xf32>, vector<32x128xf32>, vector<32x128xf32> -> vector<32x128xf32>
    %c0_8 = arith.constant 0 : index
    %c0_9 = arith.constant 0 : index
    %17 = vector.load %arg5[%c0_8, %c0_9] : memref<32x1xf32, #tpu.memory_space<vmem>>, vector<32x1xf32>
    %18 = vector.broadcast %17 : vector<32x1xf32> to vector<32x128xf32>
    %19 = arith.addf %16, %18 : vector<32x128xf32>
    %20 = arith.negf %19 : vector<32x128xf32>
    %21 = math.exp %20 : vector<32x128xf32>
    %cst_10 = arith.constant 1.000000e+00 : f32
    %22 = vector.broadcast %cst_10 : f32 to vector<32x128xf32>
    %23 = arith.addf %22, %21 : vector<32x128xf32>
    %24 = arith.divf %22, %23 : vector<32x128xf32>
    %25 = arith.mulf %19, %24 : vector<32x128xf32>
    %c0_11 = arith.constant 0 : index
    %c0_12 = arith.constant 0 : index
    %26 = vector.load %arg6[%c0_11, %c0_12] : memref<8x32xf32, #tpu.memory_space<vmem>>, vector<8x32xf32>
    %cst_13 = arith.constant dense<0.000000e+00> : vector<8x128xf32>
    %27 = tpu.matmul %26, %25, %cst_13 {dimension_numbers = #tpu.dot_dimension_numbers<[1], [0], [0], [1], [0, 0, 1, 1], [], []>} : vector<8x32xf32>, vector<32x128xf32>, vector<8x128xf32> -> vector<8x128xf32>
    %c0_14 = arith.constant 0 : index
    %c0_15 = arith.constant 0 : index
    %28 = vector.load %arg7[%c0_14, %c0_15] : memref<8x1xf32, #tpu.memory_space<vmem>>, vector<8x1xf32>
    %29 = vector.broadcast %28 : vector<8x1xf32> to vector<8x128xf32>
    %30 = arith.addf %27, %29 : vector<8x128xf32>
    %c0_16 = arith.constant 0 : index
    %c0_17 = arith.constant 0 : index
    %31 = vector.load %arg8[%c0_16, %c0_17] : memref<8x128xf32, #tpu.memory_space<vmem>>, vector<8x128xf32>
    tpu.vector_store %arg8[%c0_16, %c0_17], %30 {strides = array<i32>} : memref<8x128xf32, #tpu.memory_space<vmem>>, vector<8x128xf32>,
    return
  }
  func.func @transform_0(%arg0: i32) -> (i32, i32) {
    %c0_i32 = arith.constant 0 : i32
    %c0_i32_0 = arith.constant 0 : i32
    %c0_i32_1 = arith.constant 0 : i32
    return %c0_i32, %c0_i32_0 : i32, i32
  }
  func.func @transform_1(%arg0: i32) -> (i32, i32) {
    %c0_i32 = arith.constant 0 : i32
    %c0_i32_0 = arith.constant 0 : i32
    %c0_i32_1 = arith.constant 0 : i32
    return %c0_i32, %c0_i32_0 : i32, i32
  }
  func.func @transform_2(%arg0: i32) -> (i32, i32) {
    %c0_i32 = arith.constant 0 : i32
    %c0_i32_0 = arith.constant 0 : i32
    %c0_i32_1 = arith.constant 0 : i32
    return %c0_i32, %c0_i32_0 : i32, i32
  }
  func.func @transform_3(%arg0: i32) -> (i32, i32) {
    %c0_i32 = arith.constant 0 : i32
    %c0_i32_0 = arith.constant 0 : i32
    %c0_i32_1 = arith.constant 0 : i32
    return %c0_i32, %c0_i32_0 : i32, i32
  }
  func.func @transform_4(%arg0: i32) -> (i32, i32) {
    %c0_i32 = arith.constant 0 : i32
    %c0_i32_0 = arith.constant 0 : i32
    %c0_i32_1 = arith.constant 0 : i32
    return %c0_i32, %c0_i32_0 : i32, i32
  }
  func.func @transform_5(%arg0: i32) -> (i32, i32) {
    %c0_i32 = arith.constant 0 : i32
    %c0_i32_0 = arith.constant 0 : i32
    %c0_i32_1 = arith.constant 0 : i32
    return %c0_i32, %c0_i32_0 : i32, i32
  }
  func.func @transform_6(%arg0: i32) -> (i32, i32) {
    %c0_i32 = arith.constant 0 : i32
    %c0_i32_0 = arith.constant 0 : i32
    %c0_i32_1 = arith.constant 0 : i32
    return %c0_i32, %c0_i32_0 : i32, i32
  }
  func.func @transform_7(%arg0: i32) -> (i32, i32) {
    %c0_i32 = arith.constant 0 : i32
    %c0_i32_0 = arith.constant 0 : i32
    %c0_i32_1 = arith.constant 0 : i32
    return %c0_i32, %c0_i32_0 : i32, i32
  }
}

</mosaic_0001>

<llo_original>
// kernel: tpu_custom_call.1
$region0: #{tpu_custom_call.1}
  #allocation0 [shape = 'u32[]', space=smem, size = 0x4, offset = 0x4, fixed_abs, tag = 'smem constant byte address 0x4 - core index']
  #allocation1 [shape = 'u32[144,128]{1,0:T(1,128)}', space=vmem, size = 0x12000, scoped, tag = 'internal scratch']
  %s0 = inlined_call_operand.vmem [shape: f32[1,128], index: 0, kind: input, shape index: {}]
  %s1 = inlined_call_operand.vmem [shape: f32[32,1], index: 1, kind: input, shape index: {}]
  %s2 = inlined_call_operand.vmem [shape: f32[32,1], index: 2, kind: input, shape index: {}]
  %s3 = inlined_call_operand.vmem [shape: f32[32,32], index: 3, kind: input, shape index: {}]
  %s4 = inlined_call_operand.vmem [shape: f32[32,1], index: 4, kind: input, shape index: {}]
  %s5 = inlined_call_operand.vmem [shape: f32[8,32], index: 5, kind: input, shape index: {}]
  %s6 = inlined_call_operand.vmem [shape: f32[8,1], index: 6, kind: input, shape index: {}]
  %s7 = inlined_call_operand.hbm [shape: f32[8,128], index: 7, kind: output, shape index: {}]
  %s8 = sld [smem:[#allocation0]]
  $region38: #{tpu_custom_call.1} parent=0
    _
  %s10 = ssub.s32 1, %s8
  %s11 = scalar_select 0, %s10, %s8
  $region1: #{tpu_custom_call.1} parent=0
    #allocation2 [shape = 'u8[4096]{0}', space=vmem, size = 0x1000, scoped, tag = 'output window, operand 0, single buffered']
    #allocation3 [shape = 's32[1]{0}', space=sflag, size = 0x4, scoped, tag = 'scoped memory for tpu_custom_call.1']
    %12 = vsyncpa [#allocation3], 0
    // Predicated region
    $region2: #{tpu_custom_call.1} parent=1 // pred_check
      _
    $region3: #{tpu_custom_call.1} parent=1 // pred_check_branch
      %14 = sbr.rel (0) target = $region5
    $region4: #{tpu_custom_call.1} parent=1 // pred_region
      _
    $region5: #{tpu_custom_call.1} parent=1 // pred_fallthru
      _
    // Predicated region
    $region6: #{tpu_custom_call.1} parent=1 // pred_check
      _
    $region7: #{tpu_custom_call.1} parent=1 // pred_check_branch
      %16 = sbr.rel (0) target = $region9
    $region8: #{tpu_custom_call.1} parent=1 // pred_region
      _
    $region9: #{tpu_custom_call.1} parent=1 // pred_fallthru
      _
    // Predicated region
    $region10: #{tpu_custom_call.1} parent=1 // pred_check
      _
    $region11: #{tpu_custom_call.1} parent=1 // pred_check_branch
      %18 = sbr.rel (0) target = $region13
    $region12: #{tpu_custom_call.1} parent=1 // pred_region
      _
    $region13: #{tpu_custom_call.1} parent=1 // pred_fallthru
      _
    // Predicated region
    $region14: #{tpu_custom_call.1} parent=1 // pred_check
      _
    $region15: #{tpu_custom_call.1} parent=1 // pred_check_branch
      %20 = sbr.rel (0) target = $region17
    $region16: #{tpu_custom_call.1} parent=1 // pred_region
      _
    $region17: #{tpu_custom_call.1} parent=1 // pred_fallthru
      _
    // Predicated region
    $region18: #{tpu_custom_call.1} parent=1 // pred_check
      _
    $region19: #{tpu_custom_call.1} parent=1 // pred_check_branch
      %22 = sbr.rel (0) target = $region21
    $region20: #{tpu_custom_call.1} parent=1 // pred_region
      _
    $region21: #{tpu_custom_call.1} parent=1 // pred_fallthru
      _
    // Predicated region
    $region22: #{tpu_custom_call.1} parent=1 // pred_check
      _
    $region23: #{tpu_custom_call.1} parent=1 // pred_check_branch
      %24 = sbr.rel (0) target = $region25
    $region24: #{tpu_custom_call.1} parent=1 // pred_region
      _
    $region25: #{tpu_custom_call.1} parent=1 // pred_fallthru
      _
    // Predicated region
    $region26: #{tpu_custom_call.1} parent=1 // pred_check
      _
    $region27: #{tpu_custom_call.1} parent=1 // pred_check_branch
      %26 = sbr.rel (0) target = $region29
    $region28: #{tpu_custom_call.1} parent=1 // pred_region
      _
    $region29: #{tpu_custom_call.1} parent=1 // pred_fallthru
      _
    %v27 = vld [vmem:[%s0] sm:$0x1]
    %v28 = vld [vmem:[%s1] sm:$0xff]
    %v29 = vld [vmem:[%s1 + $0x8] sm:$0xff]
    %v30 = vld [vmem:[%s1 + $0x10] sm:$0xff]
    %v31 = vld [vmem:[%s1 + $0x18] sm:$0xff]
    %v32 = vld [vmem:[%s2] sm:$0xff]
    %v33 = vld [vmem:[%s2 + $0x8] sm:$0xff]
    %v34 = vld [vmem:[%s2 + $0x10] sm:$0xff]
    %v35 = vld [vmem:[%s2 + $0x18] sm:$0xff]
    %37 = vset.pattern.permute.xlu0 0
    %38 = vperm.xlu0 %37, %v32
    %v39 = vpop.permute.xlu0 %38
    %42 = vset.pattern.permute.xlu0 0
    %43 = vperm.xlu0 %42, %v33
    %v44 = vpop.permute.xlu0 %43
    %47 = vset.pattern.permute.xlu0 0
    %48 = vperm.xlu0 %47, %v34
    %v49 = vpop.permute.xlu0 %48
    %52 = vset.pattern.permute.xlu0 0
    %53 = vperm.xlu0 %52, %v35
    %v54 = vpop.permute.xlu0 %53
    %57 = vset.pattern.permute.xlu0 0
    %58 = vperm.xlu0 %57, %v28
    %v59 = vpop.permute.xlu0 %58
    %62 = vset.pattern.permute.xlu0 0
    %63 = vperm.xlu0 %62, %v29
    %v64 = vpop.permute.xlu0 %63
    %67 = vset.pattern.permute.xlu0 0
    %68 = vperm.xlu0 %67, %v30
    %v69 = vpop.permute.xlu0 %68
    %72 = vset.pattern.permute.xlu0 0
    %73 = vperm.xlu0 %72, %v31
    %v74 = vpop.permute.xlu0 %73
    %v77 = vlaneseq
    %v78 = vshrl.u32 %v77, 7
    %v79 = vsub.s32 0, %v78
    %v80 = vrot.slane %v27, %v79
    %v82 = vmul.f32 %v59, %v80
    %v83 = vmul.f32 %v64, %v80
    %v84 = vmul.f32 %v69, %v80
    %v85 = vmul.f32 %v74, %v80
    %v86 = vadd.f32 %v39, %v82
    %v87 = vadd.f32 %v44, %v83
    %v88 = vadd.f32 %v49, %v84
    %v89 = vadd.f32 %v54, %v85
    %v90 = vxor.u32 %v86, 2147483648
    %v91 = vxor.u32 %v87, 2147483648
    %v92 = vxor.u32 %v88, 2147483648
    %v93 = vxor.u32 %v89, 2147483648
    %v94 = vmul.f32 %v90, 1.442695
    %v95 = vpow.pop %v94
    %v96 = vmul.f32 %v91, 1.442695
    %v97 = vpow.pop %v96
    %v98 = vmul.f32 %v92, 1.442695
    %v99 = vpow.pop %v98
    %v100 = vmul.f32 %v93, 1.442695
    %v101 = vpow.pop %v100
    %v102 = vadd.f32 %v95, 1.0
    %v103 = vadd.f32 %v97, 1.0
    %v104 = vadd.f32 %v99, 1.0
    %v105 = vadd.f32 %v101, 1.0
    %v106 = vrcp.pop %v102
    %v107 = vmul.f32 1.0, %v106
    %v108 = vrcp.pop %v103
    %v109 = vmul.f32 1.0, %v108
    %v110 = vrcp.pop %v104
    %v111 = vmul.f32 1.0, %v110
    %v112 = vrcp.pop %v105
    %v113 = vmul.f32 1.0, %v112
    %v114 = vmul.f32 %v86, %v107
    %v115 = vmul.f32 %v87, %v109
    %v116 = vmul.f32 %v88, %v111
    %v117 = vmul.f32 %v89, %v113
    %v118 = vld [vmem:[%s3] sm:$0xff]
    %v119 = vld [vmem:[%s3 + $0x8] sm:$0xff]
    %v120 = vld [vmem:[%s3 + $0x10] sm:$0xff]
    %v121 = vld [vmem:[%s3 + $0x18] sm:$0xff]
    %v122 = vld [vmem:[%s4] sm:$0xff]
    %v123 = vld [vmem:[%s4 + $0x8] sm:$0xff]
    %v124 = vld [vmem:[%s4 + $0x10] sm:$0xff]
    %v125 = vld [vmem:[%s4 + $0x18] sm:$0xff]
    %127 = vset.pattern.permute.xlu0 0
    %128 = vperm.xlu0 %127, %v122
    %v129 = vpop.permute.xlu0 %128
    %132 = vset.pattern.permute.xlu0 0
    %133 = vperm.xlu0 %132, %v123
    %v134 = vpop.permute.xlu0 %133
    %137 = vset.pattern.permute.xlu0 0
    %138 = vperm.xlu0 %137, %v124
    %v139 = vpop.permute.xlu0 %138
    %142 = vset.pattern.permute.xlu0 0
    %143 = vperm.xlu0 %142, %v125
    %v144 = vpop.permute.xlu0 %143
    %vm146 = vcmask 261120
    %v148 = vsel %vm146, %v118, 0
    %v151 = vsel %vm146, %v119, 0
    %v154 = vsel %vm146, %v120, 0
    %v157 = vsel %vm146, %v121, 0
    %159 = vmatprep.subr.mxu0 0.0
    %160 = vmatpush1.msra.mxu0 %v114
    %161 = vmatprep.subr.mxu0 0.0
    %162 = vmatpush1.msra.mxu0 %v115
    %163 = vmatprep.subr.mxu0 0.0
    %164 = vmatpush1.msra.mxu0 %v116
    %165 = vmatprep.subr.mxu0 0.0
    %166 = vmatpush1.msra.mxu0 %v117
    %167 = vmatprep.subr.mxu0 0.0
    %168 = vmatpush1.msra.mxu0 0.0
    %169 = vmatprep.subr.mxu0 0.0
    %170 = vmatpush1.msra.mxu0 0.0
    %171 = vmatprep.subr.mxu0 0.0
    %172 = vmatpush1.msra.mxu0 0.0
    %173 = vmatprep.subr.mxu0 0.0
    %174 = vmatpush1.msra.mxu0 0.0
    %175 = vmatprep.subr.mxu0 0.0
    %176 = vmatpush1.msra.mxu0 0.0
    %177 = vmatprep.subr.mxu0 0.0
    %178 = vmatpush1.msra.mxu0 0.0
    %179 = vmatprep.subr.mxu0 0.0
    %180 = vmatpush1.msra.mxu0 0.0
    %181 = vmatprep.subr.mxu0 0.0
    %182 = vmatpush1.msra.mxu0 0.0
    %183 = vmatprep.subr.mxu0 0.0
    %184 = vmatpush1.msra.mxu0 0.0
    %185 = vmatprep.subr.mxu0 0.0
    %186 = vmatpush1.msra.mxu0 0.0
    %187 = vmatprep.subr.mxu0 0.0
    %188 = vmatpush1.msra.mxu0 0.0
    %189 = vmatprep.subr.mxu0 0.0
    %190 = vmatpush1.msra.mxu0 0.0
    %191 = vmatprep.subr.mxu0 0.0
    %192 = vmatpush1.msra.mxu0 0.0
    %193 = vmatprep.subr.mxu0 0.0
    %194 = vmatpush1.msra.mxu0 0.0
    %195 = vmatprep.subr.mxu0 0.0
    %196 = vmatpush1.msra.mxu0 0.0
    %197 = vmatprep.subr.mxu0 0.0
    %198 = vmatpush1.msra.mxu0 0.0
    %199 = vmatprep.subr.mxu0 0.0
    %200 = vmatpush1.msra.mxu0 0.0
    %201 = vmatprep.subr.mxu0 0.0
    %202 = vmatpush1.msra.mxu0 0.0
    %203 = vmatprep.subr.mxu0 0.0
    %204 = vmatpush1.msra.mxu0 0.0
    %205 = vmatprep.subr.mxu0 0.0
    %206 = vmatpush1.msra.mxu0 0.0
    %207 = vmatprep.subr.mxu0 0.0
    %208 = vmatpush1.msra.mxu0 0.0
    %209 = vmatprep.subr.mxu0 0.0
    %210 = vmatpush1.msra.mxu0 0.0
    %211 = vmatprep.subr.mxu0 0.0
    %212 = vmatpush1.msra.mxu0 0.0
    %213 = vmatprep.subr.mxu0 0.0
    %214 = vmatpush1.msra.mxu0 0.0
    %215 = vmatprep.subr.mxu0 0.0
    %216 = vmatpush1.msra.mxu0 0.0
    %217 = vmatprep.subr.mxu0 0.0
    %218 = vmatpush1.msra.mxu0 0.0
    %219 = vmatprep.subr.mxu0 0.0
    %220 = vmatpush1.msra.mxu0 0.0
    %221 = vmatprep.subr.mxu0 0.0
    %222 = vmatpush1.msra.mxu0 0.0
    %223 = vmatprep.mubr.f32.mxu0 0.0
    %224 = vmatmul.mubr.f32.gmra.mrb[0].mxu0 %v148
    %v225 = vpop.f32.mrb[0].mxu0
    %v226 = vadd.f32 %v129, %v225
    %v227 = vpop.f32.mrb[0].mxu0
    %228 = vmatprep.mubr.f32.mxu0 0.0
    %229 = vmatmul.mubr.f32.gmra.mrb[0].mxu0 %v151
    %v230 = vpop.f32.mrb[0].mxu0
    %v231 = vadd.f32 %v134, %v230
    %v232 = vpop.f32.mrb[0].mxu0
    %233 = vmatprep.mubr.f32.mxu0 0.0
    %234 = vmatmul.mubr.f32.gmra.mrb[0].mxu0 %v154
    %v235 = vpop.f32.mrb[0].mxu0
    %v236 = vadd.f32 %v139, %v235
    %v237 = vpop.f32.mrb[0].mxu0
    %238 = vmatprep.mubr.f32.mxu0 0.0
    %239 = vmatmul.mubr.f32.gmra.mrb[0].mxu0 %v157
    %v240 = vpop.f32.mrb[0].mxu0
    %v241 = vadd.f32 %v144, %v240
    %v242 = vpop.f32.mrb[0].mxu0
    %243 = vdwg.mxu0
    %v244 = vxor.u32 %v226, 2147483648
    %v245 = vxor.u32 %v231, 2147483648
    %v246 = vxor.u32 %v236, 2147483648
    %v247 = vxor.u32 %v241, 2147483648
    %v248 = vmul.f32 %v244, 1.442695
    %v249 = vpow.pop %v248
    %v250 = vmul.f32 %v245, 1.442695
    %v251 = vpow.pop %v250
    %v252 = vmul.f32 %v246, 1.442695
    %v253 = vpow.pop %v252
    %v254 = vmul.f32 %v247, 1.442695
    %v255 = vpow.pop %v254
    %v256 = vadd.f32 %v249, 1.0
    %v257 = vadd.f32 %v251, 1.0
    %v258 = vadd.f32 %v253, 1.0
    %v259 = vadd.f32 %v255, 1.0
    %v260 = vrcp.pop %v256
    %v261 = vmul.f32 1.0, %v260
    %v262 = vrcp.pop %v257
    %v263 = vmul.f32 1.0, %v262
    %v264 = vrcp.pop %v258
    %v265 = vmul.f32 1.0, %v264
    %v266 = vrcp.pop %v259
    %v267 = vmul.f32 1.0, %v266
    %v268 = vmul.f32 %v226, %v261
    %v269 = vmul.f32 %v231, %v263
    %v270 = vmul.f32 %v236, %v265
    %v271 = vmul.f32 %v241, %v267
    %v272 = vld [vmem:[%s5] sm:$0xff]
    %v273 = vld [vmem:[%s6] sm:$0xff]
    %275 = vset.pattern.permute.xlu0 0
    %276 = vperm.xlu0 %275, %v273
    %v277 = vpop.permute.xlu0 %276
    %v280 = vsel %vm146, %v272, 0
    %282 = vmatprep.subr.mxu0 0.0
    %283 = vmatpush1.msra.mxu0 %v268
    %284 = vmatprep.subr.mxu0 0.0
    %285 = vmatpush1.msra.mxu0 %v269
    %286 = vmatprep.subr.mxu0 0.0
    %287 = vmatpush1.msra.mxu0 %v270
    %288 = vmatprep.subr.mxu0 0.0
    %289 = vmatpush1.msra.mxu0 %v271
    %290 = vmatprep.subr.mxu0 0.0
    %291 = vmatpush1.msra.mxu0 0.0
    %292 = vmatprep.subr.mxu0 0.0
    %293 = vmatpush1.msra.mxu0 0.0
    %294 = vmatprep.subr.mxu0 0.0
    %295 = vmatpush1.msra.mxu0 0.0
    %296 = vmatprep.subr.mxu0 0.0
    %297 = vmatpush1.msra.mxu0 0.0
    %298 = vmatprep.subr.mxu0 0.0
    %299 = vmatpush1.msra.mxu0 0.0
    %300 = vmatprep.subr.mxu0 0.0
    %301 = vmatpush1.msra.mxu0 0.0
    %302 = vmatprep.subr.mxu0 0.0
    %303 = vmatpush1.msra.mxu0 0.0
    %304 = vmatprep.subr.mxu0 0.0
    %305 = vmatpush1.msra.mxu0 0.0
    %306 = vmatprep.subr.mxu0 0.0
    %307 = vmatpush1.msra.mxu0 0.0
    %308 = vmatprep.subr.mxu0 0.0
    %309 = vmatpush1.msra.mxu0 0.0
    %310 = vmatprep.subr.mxu0 0.0
    %311 = vmatpush1.msra.mxu0 0.0
    %312 = vmatprep.subr.mxu0 0.0
    %313 = vmatpush1.msra.mxu0 0.0
    %314 = vmatprep.subr.mxu0 0.0
    %315 = vmatpush1.msra.mxu0 0.0
    %316 = vmatprep.subr.mxu0 0.0
    %317 = vmatpush1.msra.mxu0 0.0
    %318 = vmatprep.subr.mxu0 0.0
    %319 = vmatpush1.msra.mxu0 0.0
    %320 = vmatprep.subr.mxu0 0.0
    %321 = vmatpush1.msra.mxu0 0.0
    %322 = vmatprep.subr.mxu0 0.0
    %323 = vmatpush1.msra.mxu0 0.0
    %324 = vmatprep.subr.mxu0 0.0
    %325 = vmatpush1.msra.mxu0 0.0
    %326 = vmatprep.subr.mxu0 0.0
    %327 = vmatpush1.msra.mxu0 0.0
    %328 = vmatprep.subr.mxu0 0.0
    %329 = vmatpush1.msra.mxu0 0.0
    %330 = vmatprep.subr.mxu0 0.0
    %331 = vmatpush1.msra.mxu0 0.0
    %332 = vmatprep.subr.mxu0 0.0
    %333 = vmatpush1.msra.mxu0 0.0
    %334 = vmatprep.subr.mxu0 0.0
    %335 = vmatpush1.msra.mxu0 0.0
    %336 = vmatprep.subr.mxu0 0.0
    %337 = vmatpush1.msra.mxu0 0.0
    %338 = vmatprep.subr.mxu0 0.0
    %339 = vmatpush1.msra.mxu0 0.0
    %340 = vmatprep.subr.mxu0 0.0
    %341 = vmatpush1.msra.mxu0 0.0
    %342 = vmatprep.subr.mxu0 0.0
    %343 = vmatpush1.msra.mxu0 0.0
    %344 = vmatprep.subr.mxu0 0.0
    %345 = vmatpush1.msra.mxu0 0.0
    %346 = vmatprep.mubr.f32.mxu0 0.0
    %347 = vmatmul.mubr.f32.gmra.mrb[0].mxu0 %v280
    %v348 = vpop.f32.mrb[0].mxu0
    %v349 = vadd.f32 %v277, %v348
    %v350 = vpop.f32.mrb[0].mxu0
    %351 = vdwg.mxu0
    %352 = vst [vmem:[#allocation2] sm:$0xff] %v349
    // Predicated region
    $region30: #{tpu_custom_call.1} parent=1 // pred_check
      _
    $region31: #{tpu_custom_call.1} parent=1 // pred_check_branch
      %354 = sbr.rel (0) target = $region33
    $region32: #{tpu_custom_call.1} parent=1 // pred_region
      %s356 = ssub.s32 128, 128
      %357 = vsyncadd [#allocation3], %s356
      %s359 = sshll.u32 [#allocation2], 4
      %s360 = int_to_ptr.vmem [resolvable:$true] %s359
      %362 = dma.vmem_to_hbm [thread:$0]  %s360, 128, %s7, [#allocation3]
    $region33: #{tpu_custom_call.1} parent=1 // pred_fallthru
      _
    // Predicated region
    $region34: #{tpu_custom_call.1} parent=1 // pred_check
      _
    $region35: #{tpu_custom_call.1} parent=1 // pred_check_branch
      %364 = sbr.rel (0) target = $region37
    $region36: #{tpu_custom_call.1} parent=1 // pred_region
      %365 = dma.done [#allocation3], 128
    $region37: #{tpu_custom_call.1} parent=1 // pred_fallthru
      _
    %366 = vsyncpa [#allocation3], 1

</llo_original>
